<compile_context>
chip_gen: v5e
topology: v5e:2x2
jax: 0.10.0
libtpu: 0.0.40
codegen_flags: <defaults>
</compile_context>

<pallas_src>
import functools
import math

import jax
import jax.numpy as jnp
from jax.experimental import pallas as pl
from jax.experimental.pallas import tpu as pltpu

_VMEM_LIMIT = 64 * 1024 * 1024  # explicit scoped-VMEM budget (fits v7x physical)


# ----------------------------------------------------------------------------
# Tile-size helpers: always return a size that divides the dim and satisfies the
# TPU (8, 128) block constraint (falling back to the full dim for toy shapes).
# ----------------------------------------------------------------------------
def _pick_row_tile(n, pref=256):
    for t in (pref, 512, 256, 128, 64, 32, 16, 8):
        if t <= n and n % t == 0:
            return t
    return n


def _pick_col_tile(c, pref=512):
    for t in (pref, 256, 128):
        if t <= c and c % t == 0:
            return t
    return c


def _pick_time_block(t_len, pref=16):
    # Capped at 16: the recurrence body is a static unroll, so keep the
    # unrolled chain (and its live ranges / VMEM block) bounded.
    for t in (pref, 8):
        if t <= t_len and t_len % t == 0:
            return t
    return t_len


def _pick_batch_tile(b, pref=64):
    for t in (pref, 32, 16, 8, 4, 2):
        if t <= b and b % t == 0:
            return t
    return b


# ----------------------------------------------------------------------------
# Kernel 1: input projection  out = x @ W_ih^T + (b_ih + b_hh)
# Row/col tiled with a K-reduction grid axis (f32 accumulator, bias at finalize).
# Weights are passed pre-transposed AND pre-cast to bf16; the activation tile is
# cast to bf16 in-kernel so the MXU runs native bf16 passes.
# ----------------------------------------------------------------------------
def matmul_bias_kernel(x_ref, wT_ref, b_ref, out_ref, acc_ref):
    k = pl.program_id(2)

    @pl.when(k == 0)
    def _():
        acc_ref[...] = jnp.zeros_like(acc_ref)

    acc_ref[...] += jnp.dot(
        x_ref[...].astype(jnp.bfloat16), wT_ref[...],
        preferred_element_type=jnp.float32)

    @pl.when(k == pl.num_programs(2) - 1)
    def _():
        out_ref[...] = (acc_ref[...] + b_ref[...]).astype(out_ref.dtype)


def run_matmul_bias(x, wT_bf16, b, *, row_pref=256, col_pref=512, k_pref=512):
    n, kdim = x.shape
    _, c = wT_bf16.shape
    tn = _pick_row_tile(n, row_pref)
    tc = _pick_col_tile(c, col_pref)
    tk = _pick_col_tile(kdim, k_pref)
    grid = (n // tn, c // tc, kdim // tk)
    return pl.pallas_call(
        matmul_bias_kernel,
        out_shape=jax.ShapeDtypeStruct((n, c), jnp.float32),
        grid_spec=pltpu.PrefetchScalarGridSpec(
            num_scalar_prefetch=0,
            grid=grid,
            in_specs=[
                pl.BlockSpec((tn, tk), lambda i, j, kk: (i, kk)),   # activations
                pl.BlockSpec((tk, tc), lambda i, j, kk: (kk, j)),   # W^T tile (bf16)
                pl.BlockSpec((1, tc), lambda i, j, kk: (0, j)),     # bias tile (f32)
            ],
            out_specs=pl.BlockSpec((tn, tc), lambda i, j, kk: (i, j)),
            scratch_shapes=[pltpu.VMEM((tn, tc), jnp.float32)],
        ),
        compiler_params=pltpu.CompilerParams(
            dimension_semantics=("parallel", "parallel", "arbitrary"),
            vmem_limit_bytes=_VMEM_LIMIT),
    )(x, wT_bf16, b)


# ----------------------------------------------------------------------------
# Kernel 2: Elman recurrence  h_t = tanh(xproj_t + h_{t-1} @ W_hh^T)
# grid = (B // bt, T // TB): batch axis "parallel" (v7x megacore), time axis
# sequential ("arbitrary").  TB <= 16 timesteps per grid step, statically
# unrolled; the f32 hidden state is carried in VMEM scratch; W_hh^T is bf16 and
# its block index is constant so Pallas does not re-fetch it across steps.
# ----------------------------------------------------------------------------
def recurrence_kernel(xproj_ref, whhT_ref, hout_ref, h_carry):
    @pl.when(pl.program_id(1) == 0)
    def _():
        h_carry[...] = jnp.zeros_like(h_carry)

    whhT = whhT_ref[...]                     # (H, H) bf16, VMEM-resident
    h = h_carry[...]                         # (bt, H) f32 carry
    tb = xproj_ref.shape[1]
    for t in range(tb):                      # static unroll (TB <= 16)
        pre = xproj_ref[:, t, :] + jnp.dot(
            h.astype(jnp.bfloat16), whhT, preferred_element_type=jnp.float32)
        h = jnp.tanh(pre)                    # tanh / carry stay f32
        hout_ref[:, t, :] = h.astype(hout_ref.dtype)
    h_carry[...] = h


def run_recurrence(xproj, whhT_bf16):
    b, t_len, h = xproj.shape
    tb = _pick_time_block(t_len)
    bt = _pick_batch_tile(b)
    grid = (b // bt, t_len // tb)
    return pl.pallas_call(
        recurrence_kernel,
        out_shape=jax.ShapeDtypeStruct((b, t_len, h), jnp.float32),
        grid_spec=pltpu.PrefetchScalarGridSpec(
            num_scalar_prefetch=0,
            grid=grid,
            in_specs=[
                pl.BlockSpec((bt, tb, h), lambda bi, ti: (bi, ti, 0)),  # xproj block
                pl.BlockSpec((h, h), lambda bi, ti: (0, 0)),            # W_hh^T bf16
            ],
            out_specs=pl.BlockSpec((bt, tb, h), lambda bi, ti: (bi, ti, 0)),
            scratch_shapes=[pltpu.VMEM((bt, h), jnp.float32)],
        ),
        compiler_params=pltpu.CompilerParams(
            dimension_semantics=("parallel", "arbitrary"),
            vmem_limit_bytes=_VMEM_LIMIT),
    )(xproj, whhT_bf16)


# ----------------------------------------------------------------------------
# Kernel 3 (FUSED head + CE): logits tile = h @ W_out^T + b_out is computed,
# written out, and consumed in-register by an online logsumexp + picked-label
# accumulation across the V grid axis.  Emits per-row NLL; logits are never
# re-read from HBM.  Row axis "parallel", V axis "arbitrary".
# ----------------------------------------------------------------------------
def head_ce_kernel(x_ref, wT_ref, b_ref, lab_ref, logits_ref, nll_ref,
                   m_scr, l_scr, p_scr):
    j = pl.program_id(1)

    @pl.when(j == 0)
    def _():
        m_scr[...] = jnp.full_like(m_scr, -jnp.inf)
        l_scr[...] = jnp.zeros_like(l_scr)
        p_scr[...] = jnp.zeros_like(p_scr)

    logits = jnp.dot(x_ref[...].astype(jnp.bfloat16), wT_ref[...],
                     preferred_element_type=jnp.float32) + b_ref[...]
    logits_ref[...] = logits.astype(logits_ref.dtype)

    # online logsumexp across V tiles (f32)
    m_new = jnp.maximum(m_scr[...], jnp.max(logits, axis=-1, keepdims=True))
    alpha = jnp.exp(m_scr[...] - m_new)
    l_scr[...] = alpha * l_scr[...] + jnp.sum(
        jnp.exp(logits - m_new), axis=-1, keepdims=True)
    m_scr[...] = m_new

    # picked-label logit: exactly one V tile contains each row's label
    tc = logits.shape[-1]
    iota = jax.lax.broadcasted_iota(jnp.int32, logits.shape, 1) + j * tc
    onehot = (iota == lab_ref[...]).astype(jnp.float32)
    p_scr[...] += jnp.sum(logits * onehot, axis=-1, keepdims=True)

    @pl.when(j == pl.num_programs(1) - 1)
    def _():
        nll_ref[...] = (m_scr[...] + jnp.log(l_scr[...])) - p_scr[...]


def run_head_ce(x, woutT_bf16, b_out, labels_col):
    n, h = x.shape
    _, v = woutT_bf16.shape
    tn = _pick_row_tile(n, 512)   # large row tile -> fewer full passes over W_out^T
    tc = _pick_col_tile(v, 512)
    grid = (n // tn, v // tc)
    logits, nll = pl.pallas_call(
        head_ce_kernel,
        out_shape=(jax.ShapeDtypeStruct((n, v), jnp.float32),
                   jax.ShapeDtypeStruct((n, 1), jnp.float32)),
        grid_spec=pltpu.PrefetchScalarGridSpec(
            num_scalar_prefetch=0,
            grid=grid,
            in_specs=[
                pl.BlockSpec((tn, h), lambda i, j: (i, 0)),   # hidden rows
                pl.BlockSpec((h, tc), lambda i, j: (0, j)),   # W_out^T tile (bf16)
                pl.BlockSpec((1, tc), lambda i, j: (0, j)),   # bias tile (f32)
                pl.BlockSpec((tn, 1), lambda i, j: (i, 0)),   # labels (int32)
            ],
            out_specs=[
                pl.BlockSpec((tn, tc), lambda i, j: (i, j)),  # logits tile
                pl.BlockSpec((tn, 1), lambda i, j: (i, 0)),   # per-row NLL
            ],
            scratch_shapes=[pltpu.VMEM((tn, 1), jnp.float32)] * 3,
        ),
        compiler_params=pltpu.CompilerParams(
            dimension_semantics=("parallel", "arbitrary"),
            vmem_limit_bytes=_VMEM_LIMIT),
    )(x, woutT_bf16, b_out, labels_col)
    return logits, nll


# ----------------------------------------------------------------------------
# Kernel 4: tiny mean-reduce of the per-row NLL column -> scalar loss.
# Row-tiled with an SMEM accumulator finalized with pl.when (negligible traffic).
# ----------------------------------------------------------------------------
def mean_kernel(nll_ref, loss_ref, acc_ref, *, inv_n):
    i = pl.program_id(0)

    @pl.when(i == 0)
    def _():
        acc_ref[0] = jnp.float32(0.0)

    acc_ref[0] += jnp.sum(nll_ref[...])

    @pl.when(i == pl.num_programs(0) - 1)
    def _():
        loss_ref[0, 0] = acc_ref[0] * inv_n


def run_mean(nll_col):
    n = nll_col.shape[0]
    tn = _pick_row_tile(n, 256)
    kern = functools.partial(mean_kernel, inv_n=1.0 / n)
    loss = pl.pallas_call(
        kern,
        out_shape=jax.ShapeDtypeStruct((1, 1), jnp.float32),
        grid_spec=pltpu.PrefetchScalarGridSpec(
            num_scalar_prefetch=0,
            grid=(n // tn,),
            in_specs=[pl.BlockSpec((tn, 1), lambda i: (i, 0))],
            out_specs=pl.BlockSpec((1, 1), lambda i: (0, 0),
                                   memory_space=pltpu.MemorySpace.SMEM),
            scratch_shapes=[pltpu.SMEM((1,), jnp.float32)],
        ),
        compiler_params=pltpu.CompilerParams(
            dimension_semantics=("arbitrary",)),
    )(nll_col)
    return loss[0, 0]


# ----------------------------------------------------------------------------
# RNNLM forward wrapper (glue: embedding gather, one-time weight transpose+cast)
# ----------------------------------------------------------------------------
def rnnlm_forward(params, input_ids, labels=None):
    b, t_len = input_ids.shape
    h = params["w_hh"].shape[0]
    v = params["w_out"].shape[0]
    d = params["embedding"].shape[1]

    # embedding lookup (plain JAX gather, batch-first)
    embedded = params["embedding"][input_ids]                      # (B, T, D) f32

    # one-time weight pre-transpose + bf16 cast / bias pre-sum (XLA glue)
    wihT = params["w_ih"].T.astype(jnp.bfloat16)                   # (D, H) bf16
    whhT = params["w_hh"].T.astype(jnp.bfloat16)                   # (H, H) bf16
    woutT = params["w_out"].T.astype(jnp.bfloat16)                 # (H, V) bf16
    b_in = (params["b_ih"] + params["b_hh"]).reshape(1, h)         # (1, H) f32
    b_out = params["b_out"].reshape(1, v)                          # (1, V) f32

    # Kernel 1: batched input projection over all B*T rows (parallel, K-tiled).
    xproj = run_matmul_bias(embedded.reshape(b * t_len, d), wihT, b_in)
    xproj = xproj.reshape(b, t_len, h)                             # free view

    # Kernel 2: sequential recurrence (batch "parallel", time "arbitrary").
    h_all = run_recurrence(xproj, whhT)                            # (B, T, H) f32

    # Kernel 3 (+4): fused vocab head + cross-entropy (+ mean reduce).
    if labels is not None:
        labels_col = labels.reshape(-1, 1).astype(jnp.int32)       # matches row order
    else:
        labels_col = jnp.zeros((b * t_len, 1), jnp.int32)          # dummy labels
    logits_2d, nll = run_head_ce(h_all.reshape(b * t_len, h), woutT, b_out, labels_col)
    logits = logits_2d.reshape(b, t_len, v)                        # (B, T, V)

    loss = run_mean(nll) if labels is not None else None
    return logits, loss


def init_params(key, vocab_size, input_size, hidden_size):
    ks = jax.random.split(key, 7)
    stdv = 1.0 / math.sqrt(hidden_size)
    u = lambda k, shape, a: jax.random.uniform(k, shape, jnp.float32, -a, a)
    return {
        "embedding": jax.random.normal(ks[0], (vocab_size, input_size), jnp.float32),
        "w_ih": u(ks[1], (hidden_size, input_size), stdv),
        "w_hh": u(ks[2], (hidden_size, hidden_size), stdv),
        "b_ih": u(ks[3], (hidden_size,), stdv),
        "b_hh": u(ks[4], (hidden_size,), stdv),
        "w_out": u(ks[5], (vocab_size, hidden_size), stdv),
        "b_out": u(ks[6], (vocab_size,), stdv),
    }


# pure-JAX f32 reference (structural sanity check of the kernel pipeline)
def _reference_forward(params, input_ids, labels):
    x = params["embedding"][input_ids]                             # (B, T, D)
    b, t_len, _ = x.shape
    hid = params["w_hh"].shape[0]
    h = jnp.zeros((b, hid), jnp.float32)
    hs = []
    for t in range(t_len):
        h = jnp.tanh(x[:, t, :] @ params["w_ih"].T + params["b_ih"]
                     + h @ params["w_hh"].T + params["b_hh"])
        hs.append(h)
    hseq = jnp.stack(hs, axis=1)
    logits = hseq @ params["w_out"].T + params["b_out"]
    lp = jax.nn.log_softmax(logits.reshape(-1, logits.shape[-1]), axis=-1)
    n = lp.shape[0]
    picked = lp[jnp.arange(n), labels.reshape(-1)]
    return logits, -jnp.mean(picked)


if __name__ == "__main__":
    # RNNLM(vocab_size=32, input_size=16, hidden_size=32, bidirectional=False)
    # NOTE: demo dims are placeholders; real workloads should pad H and V to
    # multiples of 128 (256 on v6e/v7x) for MXU-aligned, lane-dense tiles.
    # TODO(synk): bidirectional=True path (reverse-direction cell) not implemented.
    B, T = 2, 8
    VOCAB, D_IN, HID = 32, 16, 32

    key = jax.random.PRNGKey(0)
    k_par, k_inp, k_lab = jax.random.split(key, 3)

    params = init_params(k_par, VOCAB, D_IN, HID)
    input_ids = jax.random.randint(k_inp, (B, T), 0, VOCAB, dtype=jnp.int32)
    labels = jax.random.randint(k_lab, (B, T), 0, VOCAB, dtype=jnp.int32)

    logits, loss = rnnlm_forward(params, input_ids, labels)
    logits = jax.block_until_ready(logits)
    loss = jax.block_until_ready(loss)

    assert logits.shape == (B, T, VOCAB)
    assert loss.shape == ()
    assert bool(jnp.isfinite(loss))

    # structural sanity check against a pure-JAX f32 reference. Tolerance is
    # loose enough to absorb the bf16 MXU-operand rounding through the serial
    # tanh chain (carry/tanh/CE math stay f32), tight enough to catch layout
    # or transpose mistakes.
    ref_logits, ref_loss = _reference_forward(params, input_ids, labels)
    assert float(jnp.max(jnp.abs(logits - ref_logits))) < 1e-1
    assert abs(float(loss) - float(ref_loss)) < 5e-2

    print("KERNEL_OK")
</pallas_src>

<mosaic_0001>
module attributes {stable_mosaic.version = 11 : i64} {
  func.func @matmul_bias_kernel(%arg0: i32, %arg1: i32, %arg2: i32, %arg3: memref<16x16xf32, #tpu.memory_space<vmem>>, %arg4: memref<16x32xbf16, #tpu.memory_space<vmem>>, %arg5: memref<1x32xf32, #tpu.memory_space<vmem>>, %arg6: memref<16x32xf32, #tpu.memory_space<vmem>>, %arg7: memref<16x32xf32, #tpu.memory_space<vmem>>) attributes {dimension_semantics = [#tpu.dimension_semantics<parallel>, #tpu.dimension_semantics<parallel>, #tpu.dimension_semantics<arbitrary>], iteration_bounds = array<i64: 1, 1, 1>, scalar_prefetch = 0 : i64, scratch_operands = 1 : i64, tpu.core_type = #tpu.core_type<tc>, window_params = [{transform_indices = @transform_0, window_bounds = array<i64: 16, 16>}, {transform_indices = @transform_1, window_bounds = array<i64: 16, 32>}, {transform_indices = @transform_2, window_bounds = array<i64: 1, 32>}, {transform_indices = @transform_3, window_bounds = array<i64: 16, 32>}]} {
    %c0_i32 = arith.constant 0 : i32
    %0 = arith.cmpi eq, %arg2, %c0_i32 : i32
    %1 = arith.extui %0 : i1 to i32
    %c0_i32_0 = arith.constant 0 : i32
    %2 = arith.cmpi ne, %1, %c0_i32_0 : i32
    scf.if %2 {
      %cst_10 = arith.constant 0.000000e+00 : f32
      %13 = vector.broadcast %cst_10 : f32 to vector<16x32xf32>
      %c0_11 = arith.constant 0 : index
      %c0_12 = arith.constant 0 : index
      %14 = vector.load %arg7[%c0_11, %c0_12] : memref<16x32xf32, #tpu.memory_space<vmem>>, vector<16x32xf32>
      tpu.vector_store %arg7[%c0_11, %c0_12], %13 {strides = array<i32>} : memref<16x32xf32, #tpu.memory_space<vmem>>, vector<16x32xf32>,
    } else {
    }
    %c0 = arith.constant 0 : index
    %c0_1 = arith.constant 0 : index
    %3 = vector.load %arg7[%c0, %c0_1] : memref<16x32xf32, #tpu.memory_space<vmem>>, vector<16x32xf32>
    %c0_2 = arith.constant 0 : index
    %c0_3 = arith.constant 0 : index
    %4 = vector.load %arg3[%c0_2, %c0_3] : memref<16x16xf32, #tpu.memory_space<vmem>>, vector<16x16xf32>
    %5 = arith.truncf %4 : vector<16x16xf32> to vector<16x16xbf16>
    %c0_4 = arith.constant 0 : index
    %c0_5 = arith.constant 0 : index
    %6 = vector.load %arg4[%c0_4, %c0_5] : memref<16x32xbf16, #tpu.memory_space<vmem>>, vector<16x32xbf16>
    %cst = arith.constant dense<0.000000e+00> : vector<16x32xf32>
    %7 = tpu.matmul %5, %6, %cst {dimension_numbers = #tpu.dot_dimension_numbers<[1], [0], [0], [1], [0, 0, 1, 1], [], []>} : vector<16x16xbf16>, vector<16x32xbf16>, vector<16x32xf32> -> vector<16x32xf32>
    %8 = arith.addf %3, %7 : vector<16x32xf32>
    %c0_6 = arith.constant 0 : index
    %c0_7 = arith.constant 0 : index
    %9 = vector.load %arg7[%c0_6, %c0_7] : memref<16x32xf32, #tpu.memory_space<vmem>>, vector<16x32xf32>
    tpu.vector_store %arg7[%c0_6, %c0_7], %8 {strides = array<i32>} : memref<16x32xf32, #tpu.memory_space<vmem>>, vector<16x32xf32>,
    %c0_i32_8 = arith.constant 0 : i32
    %10 = arith.cmpi eq, %arg2, %c0_i32_8 : i32
    %11 = arith.extui %10 : i1 to i32
    %c0_i32_9 = arith.constant 0 : i32
    %12 = arith.cmpi ne, %11, %c0_i32_9 : i32
    scf.if %12 {
      %c0_10 = arith.constant 0 : index
      %c0_11 = arith.constant 0 : index
      %13 = vector.load %arg7[%c0_10, %c0_11] : memref<16x32xf32, #tpu.memory_space<vmem>>, vector<16x32xf32>
      %c0_12 = arith.constant 0 : index
      %c0_13 = arith.constant 0 : index
      %14 = vector.load %arg5[%c0_12, %c0_13] : memref<1x32xf32, #tpu.memory_space<vmem>>, vector<1x32xf32>
      %15 = vector.broadcast %14 : vector<1x32xf32> to vector<16x32xf32>
      %16 = arith.addf %13, %15 : vector<16x32xf32>
      %c0_14 = arith.constant 0 : index
      %c0_15 = arith.constant 0 : index
      %17 = vector.load %arg6[%c0_14, %c0_15] : memref<16x32xf32, #tpu.memory_space<vmem>>, vector<16x32xf32>
      tpu.vector_store %arg6[%c0_14, %c0_15], %16 {strides = array<i32>} : memref<16x32xf32, #tpu.memory_space<vmem>>, vector<16x32xf32>,
    } else {
    }
    return
  }
  func.func @transform_0(%arg0: i32, %arg1: i32, %arg2: i32) -> (i32, i32) {
    %c0_i32 = arith.constant 0 : i32
    return %arg0, %arg2 : i32, i32
  }
  func.func @transform_1(%arg0: i32, %arg1: i32, %arg2: i32) -> (i32, i32) {
    %c0_i32 = arith.constant 0 : i32
    return %arg2, %arg1 : i32, i32
  }
  func.func @transform_2(%arg0: i32, %arg1: i32, %arg2: i32) -> (i32, i32) {
    %c0_i32 = arith.constant 0 : i32
    %c0_i32_0 = arith.constant 0 : i32
    return %c0_i32, %arg1 : i32, i32
  }
  func.func @transform_3(%arg0: i32, %arg1: i32, %arg2: i32) -> (i32, i32) {
    %c0_i32 = arith.constant 0 : i32
    return %arg0, %arg1 : i32, i32
  }
}

</mosaic_0001>

<llo_original>
// kernel: tpu_custom_call.1
$region0: #{tpu_custom_call.1}
  #allocation0 [shape = 'u32[]', space=smem, size = 0x4, offset = 0x4, fixed_abs, tag = 'smem constant byte address 0x4 - core index']
  #allocation1 [shape = 'u32[72,128]{1,0:T(1,128)}', space=vmem, size = 0x9000, scoped, tag = 'internal scratch']
  #allocation2 [shape = 'f32[16,32]{1,0:T(8,128)}', space=vmem, size = 0x2000, scoped, tag = 'scratch operand']
  %s0 = inlined_call_operand.hbm [shape: f32[16,16], index: 0, kind: input, shape index: {}]
  %s1 = inlined_call_operand.hbm [shape: bf16[16,32], index: 1, kind: input, shape index: {}]
  %s2 = inlined_call_operand.vmem [shape: f32[1,32], index: 2, kind: input, shape index: {}]
  %s3 = inlined_call_operand.hbm [shape: f32[16,32], index: 3, kind: output, shape index: {}]
  %s4 = sld [smem:[#allocation0]]
  $region38: #{tpu_custom_call.1} parent=0
    _
  %s6 = ssub.s32 1, %s4
  %s7 = scalar_select 0, %s6, %s4
  $region1: #{tpu_custom_call.1} parent=0
    #allocation3 [shape = 'u8[8192]{0}', space=vmem, size = 0x2000, scoped, tag = 'input window, operand 0, single buffered']
    #allocation4 [shape = 's32[1]{0}', space=sflag, size = 0x4, scoped, tag = 'scoped memory for tpu_custom_call.1']
    #allocation5 [shape = 's32[1]{0}', space=sflag, size = 0x4, scoped, tag = 'scoped memory for tpu_custom_call.1']
    #allocation6 [shape = 'u8[4096]{0}', space=vmem, size = 0x1000, scoped, tag = 'input window, operand 1, single buffered']
    #allocation7 [shape = 's32[1]{0}', space=sflag, size = 0x4, scoped, tag = 'scoped memory for tpu_custom_call.1']
    #allocation8 [shape = 'u8[8192]{0}', space=vmem, size = 0x2000, scoped, tag = 'output window, operand 0, single buffered']
    %8 = vsyncpa [#allocation4], 0
    %9 = vsyncpa [#allocation7], 0
    %10 = vsyncpa [#allocation5], 0
    // Predicated region
    $region2: #{tpu_custom_call.1} parent=1 // pred_check
      _
    $region3: #{tpu_custom_call.1} parent=1 // pred_check_branch
      %12 = sbr.rel (0) target = $region5
    $region4: #{tpu_custom_call.1} parent=1 // pred_region
      %14 = vsyncadd [#allocation4], 0
      %s15 = sshll.u32 %s0, 4
      %s16 = int_to_ptr.hbm [resolvable:$true] %s15
      %s17 = sshll.u32 [#allocation3], 4
      %s18 = int_to_ptr.vmem [resolvable:$true] %s17
      %23 = dma.hbm_to_vmem [thread:$0]  %s16, 256, %s18, [#allocation4], 128, 128, 8
    $region5: #{tpu_custom_call.1} parent=1 // pred_fallthru
      _
    // Predicated region
    $region6: #{tpu_custom_call.1} parent=1 // pred_check
      _
    $region7: #{tpu_custom_call.1} parent=1 // pred_check_branch
      %25 = sbr.rel (0) target = $region9
    $region8: #{tpu_custom_call.1} parent=1 // pred_region
      %27 = vsyncadd [#allocation7], 0
      %s28 = sshll.u32 %s1, 4
      %s29 = int_to_ptr.hbm [resolvable:$true] %s28
      %s30 = sshll.u32 [#allocation6], 4
      %s31 = int_to_ptr.vmem [resolvable:$true] %s30
      %36 = dma.hbm_to_vmem [thread:$0]  %s29, 128, %s31, [#allocation7], 64, 64, 4
    $region9: #{tpu_custom_call.1} parent=1 // pred_fallthru
      _
    // Predicated region
    $region10: #{tpu_custom_call.1} parent=1 // pred_check
      _
    $region11: #{tpu_custom_call.1} parent=1 // pred_check_branch
      %38 = sbr.rel (0) target = $region13
    $region12: #{tpu_custom_call.1} parent=1 // pred_region
      _
    $region13: #{tpu_custom_call.1} parent=1 // pred_fallthru
      _
    // Predicated region
    $region14: #{tpu_custom_call.1} parent=1 // pred_check
      _
    $region15: #{tpu_custom_call.1} parent=1 // pred_check_branch
      %40 = sbr.rel (0) target = $region17
    $region16: #{tpu_custom_call.1} parent=1 // pred_region
      %42 = dma.done [#allocation4], 256
    $region17: #{tpu_custom_call.1} parent=1 // pred_fallthru
      _
    // Predicated region
    $region18: #{tpu_custom_call.1} parent=1 // pred_check
      _
    $region19: #{tpu_custom_call.1} parent=1 // pred_check_branch
      %44 = sbr.rel (0) target = $region21
    $region20: #{tpu_custom_call.1} parent=1 // pred_region
      %46 = dma.done [#allocation7], 128
    $region21: #{tpu_custom_call.1} parent=1 // pred_fallthru
      _
    %p48 = scmp.eq.s32.totalorder 0, 0
    // Predicated region
    $region22: #{tpu_custom_call.1} parent=1 // pred_check
      %p49 = pneg %p48
    $region23: #{tpu_custom_call.1} parent=1 // pred_check_branch
      %51 = sbr.rel (%p49) target = $region25
    $region24: #{tpu_custom_call.1} parent=1 // pred_region
      %vm52 = vcmask 261120
      %53 = vst.msk [vmem:[#allocation2] sm:$0xff] %vm52, 0.0
      %54 = vst.msk [vmem:[#allocation2 + $0x8] sm:$0xff] %vm52, 0.0
    $region25: #{tpu_custom_call.1} parent=1 // pred_fallthru
      _
    %v55 = vld [vmem:[#allocation2] sm:$0xff]
    %v56 = vld [vmem:[#allocation2 + $0x8] sm:$0xff]
    %v57 = vld [vmem:[#allocation3] sm:$0xff]
    %v58 = vld [vmem:[#allocation3 + $0x8] sm:$0xff]
    %v59 = vpack.c.bf16 %v58, %v57
    %v60 = vld [vmem:[#allocation6] sm:$0xf]
    %v61 = vld [vmem:[#allocation6 + $0x4] sm:$0xf]
    %v64 = vunpack.c.l.b16 %v60
    %v65 = vunpack.c.l.b16 %v61
    %v66 = vpack.c.b16 %v65, %v64
    %vm68 = vcmask 130048
    %v70 = vsel %vm68, %v59, 0
    %72 = vmatpush.bf16.msra.mxu0 0
    %73 = vmatpush.bf16.msra.mxu0 0
    %74 = vmatpush.bf16.msra.mxu0 0
    %75 = vmatpush.bf16.msra.mxu0 0
    %76 = vmatpush.bf16.msra.mxu0 0
    %77 = vmatpush.bf16.msra.mxu0 0
    %78 = vmatpush.bf16.msra.mxu0 0
    %79 = vmatpush.bf16.msra.mxu0 %v66
    %80 = vmatmul.bf16.gmra.mxu0 %v70
    %v81 = vpop.f32.mrf.mxu0
    %v82 = vadd.f32 0.0, %v81
    %v83 = vpop.f32.mrf.mxu0
    %v84 = vadd.f32 0.0, %v83
    %85 = vdwg.mxu0
    %v86 = vadd.f32 %v55, %v82
    %v87 = vadd.f32 %v56, %v84
    %vm88 = vcmask 261120
    %89 = vst.msk [vmem:[#allocation2] sm:$0xff] %vm88, %v86
    %90 = vst.msk [vmem:[#allocation2 + $0x8] sm:$0xff] %vm88, %v87
    // Predicated region
    $region26: #{tpu_custom_call.1} parent=1 // pred_check
      %p91 = pneg %p48
    $region27: #{tpu_custom_call.1} parent=1 // pred_check_branch
      %93 = sbr.rel (%p91) target = $region29
    $region28: #{tpu_custom_call.1} parent=1 // pred_region
      %v94 = vld [vmem:[#allocation2] sm:$0xff]
      %v95 = vld [vmem:[#allocation2 + $0x8] sm:$0xff]
      %v96 = vld [vmem:[%s2] sm:$0x1]
      %v98 = vperm.slane %v96, 0
      %v100 = vadd.f32 %v94, %v98
      %v101 = vadd.f32 %v95, %v98
      %102 = vst.msk [vmem:[#allocation8] sm:$0xff] %vm88, %v100
      %103 = vst.msk [vmem:[#allocation8 + $0x8] sm:$0xff] %vm88, %v101
    $region29: #{tpu_custom_call.1} parent=1 // pred_fallthru
      _
    // Predicated region
    $region30: #{tpu_custom_call.1} parent=1 // pred_check
      _
    $region31: #{tpu_custom_call.1} parent=1 // pred_check_branch
      %105 = sbr.rel (0) target = $region33
    $region32: #{tpu_custom_call.1} parent=1 // pred_region
      %107 = vsyncadd [#allocation5], 0
      %s108 = sshll.u32 [#allocation8], 4
      %s109 = int_to_ptr.vmem [resolvable:$true] %s108
      %s110 = sshll.u32 %s3, 4
      %s111 = int_to_ptr.hbm [resolvable:$true] %s110
      %116 = dma.vmem_to_hbm [thread:$0]  %s109, 256, %s111, [#allocation5], 128, 128, 8
    $region33: #{tpu_custom_call.1} parent=1 // pred_fallthru
      _
    // Predicated region
    $region34: #{tpu_custom_call.1} parent=1 // pred_check
      _
    $region35: #{tpu_custom_call.1} parent=1 // pred_check_branch
      %118 = sbr.rel (0) target = $region37
    $region36: #{tpu_custom_call.1} parent=1 // pred_region
      %120 = dma.done [#allocation5], 256
    $region37: #{tpu_custom_call.1} parent=1 // pred_fallthru
      _
    %121 = vsyncpa [#allocation4], 1
    %122 = vsyncpa [#allocation7], 1
    %123 = vsyncpa [#allocation5], 1

</llo_original>
